<compile_context>
chip_gen: v7x
topology: tpu7x:2x2x1
jax: 0.10.0
libtpu: 0.0.40
codegen_flags: <defaults>
</compile_context>

<pallas_src>
import functools
import math

import jax
import jax.numpy as jnp
from jax import lax
from jax.experimental import pallas as pl
from jax.experimental.pallas import tpu as pltpu


# ----------------------------------------------------------------------------
# helpers
# ----------------------------------------------------------------------------
def _round_up(x, m):
    return (x + m - 1) // m * m


def _pick_tile(dim, pref, align):
    """Return (tile, padded_dim).

    If the dim fits in one block we use the FULL dim (legal under the (8,128)
    rule, zero padding).  Otherwise pick the largest `align`-multiple tile
    <= pref that minimizes padding -- for BERT dims (768 / 2304 / 3072) this
    gives divisor tiles (384 / 768) and no padding at all.
    """
    if dim <= pref:
        return dim, dim
    best_t, best_pad = align, _round_up(dim, align)
    for t in range(align, pref + 1, align):
        padded = _round_up(dim, t)
        if (padded - dim, -t) < (best_pad - dim, -best_t):
            best_t, best_pad = t, padded
    return best_t, best_pad


def _maybe_pad2(a, rows, cols):
    r, c = a.shape
    if r == rows and c == cols:
        return a
    return jnp.pad(a, ((0, rows - r), (0, cols - c)))


def _as_bf16(a):
    return a if a.dtype == jnp.bfloat16 else a.astype(jnp.bfloat16)


def _as_f32(a):
    return a if a.dtype == jnp.float32 else a.astype(jnp.float32)


def _vmem_limit(block_bytes):
    # double-buffered pipeline blocks + margin; clamped to a range that is
    # safe on v5e (16 MiB scoped default / 128 MiB phys), v6e (32/128) and
    # v7x (32/64).
    need = 2 * block_bytes + (4 << 20)
    return int(min(max(need, 32 << 20), 48 << 20))


def _gelu_tanh(y):
    # TODO(synk): HF BERT uses exact erf-GELU; tanh approximation deviates ~1e-3.
    c = math.sqrt(2.0 / math.pi)
    return 0.5 * y * (1.0 + jnp.tanh(c * (y + 0.044715 * y * y * y)))


# ----------------------------------------------------------------------------
# tiled linear: y = act(x @ w + b)        (bf16 MXU inputs, f32 accumulate)
# ----------------------------------------------------------------------------
def _linear_kernel(x_ref, w_ref, b_ref, o_ref, acc_ref, *, activation):
    k = pl.program_id(2)

    @pl.when(k == 0)
    def _():
        acc_ref[...] = jnp.zeros_like(acc_ref)

    acc_ref[...] += jnp.dot(x_ref[...], w_ref[...],
                            preferred_element_type=jnp.float32)

    @pl.when(k == pl.num_programs(2) - 1)
    def _():
        y = acc_ref[...] + b_ref[...]          # f32 epilogue
        if activation == "gelu":
            y = _gelu_tanh(y)
        elif activation == "tanh":
            y = jnp.tanh(y)
        o_ref[...] = y.astype(o_ref.dtype)


def linear_pallas(x, w, b, activation="none", out_dtype=jnp.bfloat16,
                  tm_pref=512, tn_pref=768, tk_pref=768):
    M, K = x.shape
    N = w.shape[1]
    tm, Mp = _pick_tile(M, tm_pref, 8)
    tn, Np = _pick_tile(N, tn_pref, 128)
    tk, Kp = _pick_tile(K, tk_pref, 128)

    xp = _maybe_pad2(_as_bf16(x), Mp, Kp)        # no-op at real BERT dims
    wp = _maybe_pad2(_as_bf16(w), Kp, Np)
    bp = _maybe_pad2(_as_f32(b).reshape(1, N), 1, Np)

    out_bytes = jnp.dtype(out_dtype).itemsize
    blk = (tm * tk * 2 + tk * tn * 2 + tn * 4
           + tm * tn * out_bytes + tm * tn * 4)

    kernel = functools.partial(_linear_kernel, activation=activation)
    cost = pl.CostEstimate(
        flops=2 * Mp * Np * Kp,
        transcendentals=(Mp * Np if activation != "none" else 0),
        bytes_accessed=(Mp * Kp + Kp * Np) * 2 + Mp * Np * out_bytes)

    out = pl.pallas_call(
        kernel,
        out_shape=jax.ShapeDtypeStruct((Mp, Np), out_dtype),
        grid=(Mp // tm, Np // tn, Kp // tk),
        in_specs=[
            pl.BlockSpec((tm, tk), lambda i, j, k: (i, k)),
            pl.BlockSpec((tk, tn), lambda i, j, k: (k, j)),
            pl.BlockSpec((1, tn), lambda i, j, k: (0, j)),
        ],
        out_specs=pl.BlockSpec((tm, tn), lambda i, j, k: (i, j)),
        scratch_shapes=[pltpu.VMEM((tm, tn), jnp.float32)],
        compiler_params=pltpu.CompilerParams(
            dimension_semantics=("parallel", "parallel", "arbitrary"),
            vmem_limit_bytes=_vmem_limit(blk)),
        cost_estimate=cost,
    )(xp, wp, bp)

    if (Mp, Np) != (M, N):
        out = out[:M, :N]
    return out


# ----------------------------------------------------------------------------
# tiled linear fused with bias + residual + LayerNorm epilogue
#   out = LayerNorm(x @ w + b + residual)          (N = hidden, untiled)
# ----------------------------------------------------------------------------
def _linear_residual_ln_kernel(x_ref, w_ref, b_ref, res_ref, g_ref, bb_ref,
                               o_ref, acc_ref, *, eps):
    k = pl.program_id(1)

    @pl.when(k == 0)
    def _():
        acc_ref[...] = jnp.zeros_like(acc_ref)

    acc_ref[...] += jnp.dot(x_ref[...], w_ref[...],
                            preferred_element_type=jnp.float32)

    @pl.when(k == pl.num_programs(1) - 1)
    def _():
        y = acc_ref[...] + b_ref[...] + res_ref[...].astype(jnp.float32)
        mean = jnp.mean(y, axis=-1, keepdims=True)
        yc = y - mean
        var = jnp.mean(yc * yc, axis=-1, keepdims=True)
        inv = lax.rsqrt(var + eps)
        o_ref[...] = (yc * inv * g_ref[...] + bb_ref[...]).astype(o_ref.dtype)


def linear_residual_ln_pallas(x, w, b, residual, gamma, beta, eps=1e-12,
                              tm_pref=512, tk_pref=768):
    M, K = x.shape
    H = w.shape[1]
    tm, Mp = _pick_tile(M, tm_pref, 8)
    tk, Kp = _pick_tile(K, tk_pref, 128)

    xp = _maybe_pad2(_as_bf16(x), Mp, Kp)
    wp = _maybe_pad2(_as_bf16(w), Kp, H)
    rp = _maybe_pad2(_as_bf16(residual), Mp, H)
    b2 = _as_f32(b).reshape(1, H)
    g2 = _as_f32(gamma).reshape(1, H)
    bb2 = _as_f32(beta).reshape(1, H)

    blk = (tm * tk * 2 + tk * H * 2 + tm * H * 2     # x, w, residual (bf16)
           + tm * H * 2 + tm * H * 4 + 3 * H * 4)    # out bf16, acc f32, vecs

    out = pl.pallas_call(
        functools.partial(_linear_residual_ln_kernel, eps=eps),
        out_shape=jax.ShapeDtypeStruct((Mp, H), jnp.bfloat16),
        grid=(Mp // tm, Kp // tk),
        in_specs=[
            pl.BlockSpec((tm, tk), lambda i, k: (i, k)),
            pl.BlockSpec((tk, H), lambda i, k: (k, 0)),
            pl.BlockSpec((1, H), lambda i, k: (0, 0)),
            pl.BlockSpec((tm, H), lambda i, k: (i, 0)),
            pl.BlockSpec((1, H), lambda i, k: (0, 0)),
            pl.BlockSpec((1, H), lambda i, k: (0, 0)),
        ],
        out_specs=pl.BlockSpec((tm, H), lambda i, k: (i, 0)),
        scratch_shapes=[pltpu.VMEM((tm, H), jnp.float32)],
        compiler_params=pltpu.CompilerParams(
            dimension_semantics=("parallel", "arbitrary"),
            vmem_limit_bytes=_vmem_limit(blk)),
        cost_estimate=pl.CostEstimate(
            flops=2 * Mp * H * Kp, transcendentals=Mp,
            bytes_accessed=(Mp * Kp + Kp * H + 2 * Mp * H) * 2),
    )(xp, wp, b2, rp, g2, bb2)

    if Mp != M:
        out = out[:M]
    return out


# ----------------------------------------------------------------------------
# fused embedding add + LayerNorm  (word + pos + type, LN in f32, bf16 out)
# ----------------------------------------------------------------------------
def _emb_ln_kernel(w_ref, p_ref, t_ref, g_ref, b_ref, o_ref, *, eps):
    x = (w_ref[0].astype(jnp.float32) + p_ref[...].astype(jnp.float32)
         + t_ref[...].astype(jnp.float32))                      # [S, H] f32
    mean = jnp.mean(x, axis=-1, keepdims=True)
    xc = x - mean
    var = jnp.mean(xc * xc, axis=-1, keepdims=True)
    inv = lax.rsqrt(var + eps)
    o_ref[0] = (xc * inv * g_ref[...] + b_ref[...]).astype(o_ref.dtype)


def embed_layernorm_pallas(word_g, pos_emb, type_row, gamma, beta, eps=1e-12):
    B, S, H = word_g.shape
    g2 = _as_f32(gamma).reshape(1, H)
    b2 = _as_f32(beta).reshape(1, H)
    return pl.pallas_call(
        functools.partial(_emb_ln_kernel, eps=eps),
        out_shape=jax.ShapeDtypeStruct((B, S, H), jnp.bfloat16),
        grid=(B,),
        in_specs=[
            pl.BlockSpec((1, S, H), lambda b: (b, 0, 0)),
            pl.BlockSpec((S, H), lambda b: (0, 0)),
            pl.BlockSpec((1, H), lambda b: (0, 0)),
            pl.BlockSpec((1, H), lambda b: (0, 0)),
            pl.BlockSpec((1, H), lambda b: (0, 0)),
        ],
        out_specs=pl.BlockSpec((1, S, H), lambda b: (b, 0, 0)),
        compiler_params=pltpu.CompilerParams(
            dimension_semantics=("parallel",)),
    )(word_g, pos_emb, type_row, g2, b2)


# ----------------------------------------------------------------------------
# multi-head self-attention on the fused [B, S, 3H] QKV tensor
#   - dense, 128-lane-aligned loads of the Q/K/V slabs (offsets 0, H, 2H)
#   - exact softmax (f32), heads concatenated in-registers
#   - ONE full-width, lane-dense [S, H] store per grid step
# ----------------------------------------------------------------------------
def _attention_kernel(qkv_ref, m_ref, o_ref, *, heads, scale):
    S = qkv_ref.shape[1]
    H = qkv_ref.shape[2] // 3
    Dh = H // heads
    bias = m_ref[0]                                     # [1, S] additive bias

    q_all = qkv_ref[0, :, 0:H]                          # [S, H] bf16
    k_all = qkv_ref[0, :, H:2 * H]
    v_all = qkv_ref[0, :, 2 * H:3 * H]

    ctxs = []
    for hd in range(heads):
        sl = slice(hd * Dh, (hd + 1) * Dh)
        q = q_all[:, sl]
        k = k_all[:, sl]
        v = v_all[:, sl]
        # contract on last dims -> no explicit K transpose materialized
        s = lax.dot_general(q, k, (((1,), (1,)), ((), ())),
                            preferred_element_type=jnp.float32)
        s = s * scale + bias                            # f32
        mx = jnp.max(s, axis=-1, keepdims=True)
        p = jnp.exp(s - mx)
        p = p / jnp.sum(p, axis=-1, keepdims=True)      # exact softmax
        ctxs.append(jnp.dot(p.astype(v.dtype), v,
                            preferred_element_type=jnp.float32))

    # single lane-dense full-width store for the whole grid step
    o_ref[0] = jnp.concatenate(ctxs, axis=-1).astype(o_ref.dtype)


def attention_pallas(qkv, mask_bias, heads):
    # TODO(synk): flash-style KV tiling (online softmax, f32 m/l/acc scratch)
    # is required before scaling S >= ~1024; current kernel holds S x S scores.
    B, S, H3 = qkv.shape
    H = H3 // 3
    Dh = H // heads
    blk = S * H3 * 2 + 4 * S + S * H * 2 + 2 * S * S * 4
    return pl.pallas_call(
        functools.partial(_attention_kernel, heads=heads,
                          scale=1.0 / math.sqrt(Dh)),
        out_shape=jax.ShapeDtypeStruct((B, S, H), jnp.bfloat16),
        grid=(B,),
        in_specs=[
            pl.BlockSpec((1, S, H3), lambda b: (b, 0, 0)),
            pl.BlockSpec((1, 1, S), lambda b: (b, 0, 0)),
        ],
        out_specs=pl.BlockSpec((1, S, H), lambda b: (b, 0, 0)),
        compiler_params=pltpu.CompilerParams(
            dimension_semantics=("parallel",),
            vmem_limit_bytes=_vmem_limit(blk)),
        cost_estimate=pl.CostEstimate(
            flops=4 * B * heads * S * S * Dh,
            transcendentals=B * heads * S * S,
            bytes_accessed=B * S * H3 * 2 + B * S * H * 2 + B * S * 4),
    )(qkv, mask_bias)


# ----------------------------------------------------------------------------
# fused classifier head: pooled = tanh(cls @ Wp + bp);
#                        logits = (dropout(pooled @ Wl + bl)) @ Wq + bq
# (one small pallas_call instead of three padded launches)
# ----------------------------------------------------------------------------
def _head_kernel(cls_ref, wp_ref, bp_ref, wl_ref, bl_ref, wq_ref, bq_ref,
                 o_ref):
    x = cls_ref[...]
    pooled = jnp.tanh(jnp.dot(x, wp_ref[...],
                              preferred_element_type=jnp.float32)
                      + bp_ref[...])
    lin = jnp.dot(pooled.astype(jnp.bfloat16), wl_ref[...],
                  preferred_element_type=jnp.float32) + bl_ref[...]
    # TODO(synk): nn.Dropout(rate=0.2) is an inference-mode identity here.
    out = jnp.dot(lin.astype(jnp.bfloat16), wq_ref[...],
                  preferred_element_type=jnp.float32) + bq_ref[...]
    o_ref[...] = out


def classifier_head_pallas(cls, wp, bp, wl, bl, wq, bq):
    B, H = cls.shape
    U = wl.shape[1]
    C = wq.shape[1]
    return pl.pallas_call(
        _head_kernel,
        out_shape=jax.ShapeDtypeStruct((B, C), jnp.float32),
        grid=(1,),
        in_specs=[
            pl.BlockSpec((B, H), lambda i: (0, 0)),
            pl.BlockSpec((H, H), lambda i: (0, 0)),
            pl.BlockSpec((1, H), lambda i: (0, 0)),
            pl.BlockSpec((H, U), lambda i: (0, 0)),
            pl.BlockSpec((1, U), lambda i: (0, 0)),
            pl.BlockSpec((U, C), lambda i: (0, 0)),
            pl.BlockSpec((1, C), lambda i: (0, 0)),
        ],
        out_specs=pl.BlockSpec((B, C), lambda i: (0, 0)),
    )(_as_bf16(cls), _as_bf16(wp), _as_f32(bp).reshape(1, H),
      _as_bf16(wl), _as_f32(bl).reshape(1, U),
      _as_bf16(wq), _as_f32(bq).reshape(1, C))


# ----------------------------------------------------------------------------
# Deterministic synthetic parameters (stand-in for 'bert-base-cased' weights)
# ----------------------------------------------------------------------------
class _KeyGen:
    def __init__(self, key):
        self.key = key

    def __call__(self):
        self.key, sub = jax.random.split(self.key)
        return sub


def init_params(key, *, vocab, max_pos, hidden, heads, layers, intermediate,
                units, n_classes):
    kg = _KeyGen(key)
    n = lambda shape: 0.02 * jax.random.normal(kg(), shape, dtype=jnp.float32)
    nb = lambda shape: n(shape).astype(jnp.bfloat16)     # bf16 weights/tables
    z = lambda shape: jnp.zeros(shape, dtype=jnp.float32)
    o = lambda shape: jnp.ones(shape, dtype=jnp.float32)

    params = {
        "num_heads": heads,
        "word_emb": nb((vocab, hidden)),
        "pos_emb": nb((max_pos, hidden)),
        "type_emb": nb((2, hidden)),
        "emb_ln_g": o((hidden,)),
        "emb_ln_b": z((hidden,)),
        "layers": [],
        "pooler_w": nb((hidden, hidden)),
        "pooler_b": z((hidden,)),
        # classifier head (TransformerModel.linear / .pred)
        "linear_w": nb((hidden, units)),
        "linear_b": z((units,)),
        "pred_w": nb((units, n_classes)),
        "pred_b": z((n_classes,)),
    }
    for _ in range(layers):
        wq, wk, wv = n((hidden, hidden)), n((hidden, hidden)), n((hidden, hidden))
        params["layers"].append({
            # fused QKV projection weight [H, 3H]
            "wqkv": jnp.concatenate([wq, wk, wv], axis=1).astype(jnp.bfloat16),
            "bqkv": z((3 * hidden,)),
            "wo": nb((hidden, hidden)), "bo": z((hidden,)),
            "ln1_g": o((hidden,)), "ln1_b": z((hidden,)),
            "wi": nb((hidden, intermediate)), "bi": z((intermediate,)),
            "wf": nb((intermediate, hidden)), "bf": z((hidden,)),
            "ln2_g": o((hidden,)), "ln2_b": z((hidden,)),
        })
    return params


# ----------------------------------------------------------------------------
# Model forward (glue in JAX, hot paths in Pallas, bf16 residual stream)
# ----------------------------------------------------------------------------
def bert_cls_hidden(params, input_ids, attention_mask):
    B, S = input_ids.shape
    heads = params["num_heads"]
    H = params["word_emb"].shape[1]

    # Embedding gathers are glue; add + LayerNorm fused in Pallas (bf16 out).
    # TODO(synk): token_type_ids hard-coded to segment 0, like the original call.
    word_g = params["word_emb"][input_ids]            # [B, S, H] bf16
    pos = params["pos_emb"][:S]                       # [S, H]    bf16
    type_row = params["type_emb"][0:1]                # [1, H]    bf16
    h = embed_layernorm_pallas(word_g, pos, type_row,
                               params["emb_ln_g"], params["emb_ln_b"])
    h = h.reshape(B * S, H)                           # bf16 residual stream

    # BERT-style additive attention mask bias: (1 - mask) * -10000, [B, 1, S].
    mask_bias = ((1.0 - attention_mask.astype(jnp.float32)) * -10000.0
                 ).reshape(B, 1, S)

    for lyr in params["layers"]:
        # fused Q/K/V projection -> [B*S, 3H] bf16 (one HBM read of h)
        qkv = linear_pallas(h, lyr["wqkv"], lyr["bqkv"], out_dtype=jnp.bfloat16)
        ctx = attention_pallas(qkv.reshape(B, S, 3 * H), mask_bias, heads)
        ctx = ctx.reshape(B * S, H)                   # free, lane-dense reshape

        # wo matmul fused with bias + residual + LayerNorm1 (bf16 out)
        h1 = linear_residual_ln_pallas(ctx, lyr["wo"], lyr["bo"], h,
                                       lyr["ln1_g"], lyr["ln1_b"])

        # FFN: intermediate (GELU, bf16 out) then wf fused with residual + LN2
        inter = linear_pallas(h1, lyr["wi"], lyr["bi"], activation="gelu",
                              out_dtype=jnp.bfloat16)
        h = linear_residual_ln_pallas(inter, lyr["wf"], lyr["bf"], h1,
                                      lyr["ln2_g"], lyr["ln2_b"])

    return h.reshape(B, S, H)[:, 0, :]                # [CLS] hidden state


def transformer_model_forward(params, input_ids, attention_mask):
    cls = bert_cls_hidden(params, input_ids, attention_mask)
    # pooler (tanh) + self.linear + Dropout(identity) + self.pred, one kernel.
    logits = classifier_head_pallas(cls,
                                    params["pooler_w"], params["pooler_b"],
                                    params["linear_w"], params["linear_b"],
                                    params["pred_w"], params["pred_b"])
    return logits


# ----------------------------------------------------------------------------
# Demo
# ----------------------------------------------------------------------------
if __name__ == "__main__":
    B, S = 2, 8
    VOCAB, MAX_POS = 100, 16
    HIDDEN, HEADS, LAYERS, INTER = 32, 4, 2, 64
    UNITS, N_CLASSES = 16, 2

    root = jax.random.PRNGKey(0)
    k_params, k_ids = jax.random.split(root)

    params = init_params(k_params, vocab=VOCAB, max_pos=MAX_POS, hidden=HIDDEN,
                         heads=HEADS, layers=LAYERS, intermediate=INTER,
                         units=UNITS, n_classes=N_CLASSES)

    input_ids = jax.random.randint(k_ids, (B, S), 0, VOCAB, dtype=jnp.int32)
    attention_mask = jnp.ones((B, S), dtype=jnp.int32)
    attention_mask = attention_mask.at[1, -2:].set(0)   # pad last 2 tokens of row 1

    logits = transformer_model_forward(params, input_ids, attention_mask)
    jax.block_until_ready(logits)
    assert logits.shape == (B, N_CLASSES), logits.shape
    print("KERNEL_OK")
</pallas_src>

<mosaic_0001>
module attributes {stable_mosaic.version = 11 : i64} {
  func.func @_emb_ln_kernel(%arg0: i32, %arg1: memref<1x8x32xbf16, #tpu.memory_space<vmem>>, %arg2: memref<8x32xbf16, #tpu.memory_space<vmem>>, %arg3: memref<1x32xbf16, #tpu.memory_space<vmem>>, %arg4: memref<1x32xf32, #tpu.memory_space<vmem>>, %arg5: memref<1x32xf32, #tpu.memory_space<vmem>>, %arg6: memref<1x8x32xbf16, #tpu.memory_space<vmem>>) attributes {dimension_semantics = [#tpu.dimension_semantics<parallel>], iteration_bounds = array<i64: 2>, scalar_prefetch = 0 : i64, scratch_operands = 0 : i64, tpu.core_type = #tpu.core_type<tc>, window_params = [{transform_indices = @transform_0, window_bounds = array<i64: 1, 8, 32>}, {pipeline_mode = #tpu.pipeline_mode<synchronous>, transform_indices = @transform_1, window_bounds = array<i64: 8, 32>}, {pipeline_mode = #tpu.pipeline_mode<synchronous>, transform_indices = @transform_2, window_bounds = array<i64: 1, 32>}, {pipeline_mode = #tpu.pipeline_mode<synchronous>, transform_indices = @transform_3, window_bounds = array<i64: 1, 32>}, {pipeline_mode = #tpu.pipeline_mode<synchronous>, transform_indices = @transform_4, window_bounds = array<i64: 1, 32>}, {transform_indices = @transform_5, window_bounds = array<i64: 1, 8, 32>}]} {
    %c0 = arith.constant 0 : index
    %c0_0 = arith.constant 0 : index
    %c0_1 = arith.constant 0 : index
    %0 = vector.load %arg1[%c0, %c0_0, %c0_1] : memref<1x8x32xbf16, #tpu.memory_space<vmem>>, vector<1x8x32xbf16>
    %1 = vector.shape_cast %0 : vector<1x8x32xbf16> to vector<8x32xbf16>
    %2 = arith.extf %1 : vector<8x32xbf16> to vector<8x32xf32>
    %c0_2 = arith.constant 0 : index
    %c0_3 = arith.constant 0 : index
    %3 = vector.load %arg2[%c0_2, %c0_3] : memref<8x32xbf16, #tpu.memory_space<vmem>>, vector<8x32xbf16>
    %4 = arith.extf %3 : vector<8x32xbf16> to vector<8x32xf32>
    %5 = arith.addf %2, %4 : vector<8x32xf32>
    %c0_4 = arith.constant 0 : index
    %c0_5 = arith.constant 0 : index
    %6 = vector.load %arg3[%c0_4, %c0_5] : memref<1x32xbf16, #tpu.memory_space<vmem>>, vector<1x32xbf16>
    %7 = arith.extf %6 : vector<1x32xbf16> to vector<1x32xf32>
    %8 = vector.broadcast %7 : vector<1x32xf32> to vector<8x32xf32>
    %9 = arith.addf %5, %8 : vector<8x32xf32>
    %cst = arith.constant dense<0.000000e+00> : vector<8xf32>
    %10 = vector.multi_reduction <add>, %9, %cst [1] : vector<8x32xf32> to vector<8xf32>
    %11 = vector.shape_cast %10 : vector<8xf32> to vector<8x1xf32>
    %cst_6 = arith.constant 3.200000e+01 : f32
    %12 = vector.broadcast %cst_6 : f32 to vector<8x1xf32>
    %13 = arith.divf %11, %12 : vector<8x1xf32>
    %14 = vector.broadcast %13 : vector<8x1xf32> to vector<8x32xf32>
    %15 = arith.subf %9, %14 : vector<8x32xf32>
    %16 = arith.mulf %15, %15 : vector<8x32xf32>
    %cst_7 = arith.constant dense<0.000000e+00> : vector<8xf32>
    %17 = vector.multi_reduction <add>, %16, %cst_7 [1] : vector<8x32xf32> to vector<8xf32>
    %18 = vector.shape_cast %17 : vector<8xf32> to vector<8x1xf32>
    %cst_8 = arith.constant 3.200000e+01 : f32
    %19 = vector.broadcast %cst_8 : f32 to vector<8x1xf32>
    %20 = arith.divf %18, %19 : vector<8x1xf32>
    %cst_9 = arith.constant 9.99999996E-13 : f32
    %21 = vector.broadcast %cst_9 : f32 to vector<8x1xf32>
    %22 = arith.addf %20, %21 : vector<8x1xf32>
    %23 = math.rsqrt %22 : vector<8x1xf32>
    %24 = vector.broadcast %23 : vector<8x1xf32> to vector<8x32xf32>
    %25 = arith.mulf %15, %24 : vector<8x32xf32>
    %c0_10 = arith.constant 0 : index
    %c0_11 = arith.constant 0 : index
    %26 = vector.load %arg4[%c0_10, %c0_11] : memref<1x32xf32, #tpu.memory_space<vmem>>, vector<1x32xf32>
    %27 = vector.broadcast %26 : vector<1x32xf32> to vector<8x32xf32>
    %28 = arith.mulf %25, %27 : vector<8x32xf32>
    %c0_12 = arith.constant 0 : index
    %c0_13 = arith.constant 0 : index
    %29 = vector.load %arg5[%c0_12, %c0_13] : memref<1x32xf32, #tpu.memory_space<vmem>>, vector<1x32xf32>
    %30 = vector.broadcast %29 : vector<1x32xf32> to vector<8x32xf32>
    %31 = arith.addf %28, %30 : vector<8x32xf32>
    %32 = arith.truncf %31 : vector<8x32xf32> to vector<8x32xbf16>
    %c0_14 = arith.constant 0 : index
    %c0_15 = arith.constant 0 : index
    %c0_16 = arith.constant 0 : index
    %33 = vector.load %arg6[%c0_14, %c0_15, %c0_16] : memref<1x8x32xbf16, #tpu.memory_space<vmem>>, vector<1x8x32xbf16>
    %34 = vector.shape_cast %33 : vector<1x8x32xbf16> to vector<8x32xbf16>
    %35 = vector.shape_cast %32 : vector<8x32xbf16> to vector<1x8x32xbf16>
    tpu.vector_store %arg6[%c0_14, %c0_15, %c0_16], %35 {strides = array<i32>} : memref<1x8x32xbf16, #tpu.memory_space<vmem>>, vector<1x8x32xbf16>,
    return
  }
  func.func @transform_0(%arg0: i32) -> (i32, i32, i32) {
    %c0_i32 = arith.constant 0 : i32
    %c0_i32_0 = arith.constant 0 : i32
    %c0_i32_1 = arith.constant 0 : i32
    return %arg0, %c0_i32, %c0_i32_0 : i32, i32, i32
  }
  func.func @transform_1(%arg0: i32) -> (i32, i32) {
    %c0_i32 = arith.constant 0 : i32
    %c0_i32_0 = arith.constant 0 : i32
    %c0_i32_1 = arith.constant 0 : i32
    return %c0_i32, %c0_i32_0 : i32, i32
  }
  func.func @transform_2(%arg0: i32) -> (i32, i32) {
    %c0_i32 = arith.constant 0 : i32
    %c0_i32_0 = arith.constant 0 : i32
    %c0_i32_1 = arith.constant 0 : i32
    return %c0_i32, %c0_i32_0 : i32, i32
  }
  func.func @transform_3(%arg0: i32) -> (i32, i32) {
    %c0_i32 = arith.constant 0 : i32
    %c0_i32_0 = arith.constant 0 : i32
    %c0_i32_1 = arith.constant 0 : i32
    return %c0_i32, %c0_i32_0 : i32, i32
  }
  func.func @transform_4(%arg0: i32) -> (i32, i32) {
    %c0_i32 = arith.constant 0 : i32
    %c0_i32_0 = arith.constant 0 : i32
    %c0_i32_1 = arith.constant 0 : i32
    return %c0_i32, %c0_i32_0 : i32, i32
  }
  func.func @transform_5(%arg0: i32) -> (i32, i32, i32) {
    %c0_i32 = arith.constant 0 : i32
    %c0_i32_0 = arith.constant 0 : i32
    %c0_i32_1 = arith.constant 0 : i32
    return %arg0, %c0_i32, %c0_i32_0 : i32, i32, i32
  }
}

</mosaic_0001>

<llo_original>
// kernel: tpu_custom_call.1
$region0: #{tpu_custom_call.1}
  #allocation0 [shape = 'u32[]', space=smem, size = 0x4, offset = 0x4, fixed_abs, tag = 'smem constant byte address 0x4 - core index']
  #allocation1 [shape = 'u32[144,128]{1,0:T(1,128)}', space=vmem, size = 0x12000, scoped, tag = 'internal scratch']
  %s0 = inlined_call_operand.hbm [shape: bf16[2,8,32], index: 0, kind: input, shape index: {}]
  %s1 = inlined_call_operand.hbm [shape: bf16[8,32], index: 1, kind: input, shape index: {}]
  %s2 = inlined_call_operand.vmem [shape: bf16[1,32], index: 2, kind: input, shape index: {}]
  %s3 = inlined_call_operand.vmem [shape: f32[1,32], index: 3, kind: input, shape index: {}]
  %s4 = inlined_call_operand.vmem [shape: f32[1,32], index: 4, kind: input, shape index: {}]
  %s5 = inlined_call_operand.hbm [shape: bf16[2,8,32], index: 5, kind: output, shape index: {}]
  %s6 = sld [smem:[#allocation0]]
  $region61: #{tpu_custom_call.1} parent=0
    _
  %s8 = ssub.s32 1, %s6
  %s9 = scalar_select 0, %s8, %s6
  $region1: #{tpu_custom_call.1} parent=0
    #allocation2 [shape = 'u8[4096]{0}', space=vmem, size = 0x1000, scoped, tag = 'input window, operand 0']
    #allocation3 [shape = 's32[2]{0}', space=sflag, size = 0x8, scoped, tag = 'scoped memory for tpu_custom_call.1']
    #allocation4 [shape = 's32[2]{0}', space=sflag, size = 0x8, scoped, tag = 'scoped memory for tpu_custom_call.1']
    #allocation5 [shape = 'u8[2048]{0}', space=vmem, size = 0x800, scoped, tag = 'input window, operand 1, single buffered']
    #allocation6 [shape = 's32[1]{0}', space=sflag, size = 0x4, scoped, tag = 'scoped memory for tpu_custom_call.1']
    #allocation7 [shape = 'u8[4096]{0}', space=vmem, size = 0x1000, scoped, tag = 'output window, operand 0']
    %10 = vsyncpa [#allocation3], 0
    %s11 = scalar_lea.sflag [#allocation3], 1
    %12 = vsyncpa %s11, 0
    %13 = vsyncpa [#allocation6], 0
    %14 = vsyncpa [#allocation4], 0
    %s15 = scalar_lea.sflag [#allocation4], 1
    %16 = vsyncpa %s15, 0
    loop: start=0, step=1, limit=4
    $region2: #{tpu_custom_call.1} parent=1 // loop_pre_header
      _
    $region3: #{tpu_custom_call.1} parent=1 // loop_header
      %s18 = sphi 0, %s22
      %p19 = scmp.ge.s32.totalorder %s18, 4
      %s28 = sphi 0, %s30
      %s31 = sphi 0, %s28
      %s32 = sphi 0, %s31
      %s48 = sphi 0, %s32
      %s52 = sphi 0, %s52
      %s54 = sphi 0, %s52
      %s55 = sphi 0, %s54
      %s69 = sphi 0, %s55
      %s73 = sphi 0, %s73
      %s75 = sphi 0, %s73
      %s76 = sphi 0, %s75
      %s90 = sphi 0, %s76
      %s94 = sphi 0, %s94
      %s96 = sphi 0, %s94
      %s97 = sphi 0, %s96
      %s111 = sphi 0, %s97
      %s115 = sphi 0, %s115
      %s117 = sphi 0, %s115
      %s118 = sphi 0, %s117
      %s132 = sphi 0, %s118
      %s138 = sphi 0, %s140
      %s141 = sphi 0, %s138
      %s142 = sphi 0, %s141
      %s158 = sphi 0, %s142
    $region4: #{tpu_custom_call.1} parent=1 // loop_header_branch
      %21 = sbr.rel (%p19) target = $region8
    $region5: #{tpu_custom_call.1} parent=1 // loop_body
      %s23 = ssub.s32 %s18, 1
      %s24 = ssub.s32 %s18, 2
      %s25 = sadd.s32 %s18, 1
      %s26 = ssub.s32 %s18, %s25
      %p27 = scmp.eq.s32.totalorder %s26, 0
      %s29 = sadd.s32 %s28, 1
      %s30 = scalar_select %p27, %s28, %s29
      %p33 = pneg %p27
      %p34 = scmp.eq.s32.totalorder %s18, 1
      %p35 = por %p33, %p34
      %p36 = scmp.ne.s32.totalorder %s28, %s31
      %p37 = scmp.eq.s32.totalorder %s18, 0
      %p38 = por %p36, %p37
      %p39 = scmp.ne.s32.totalorder %s28, %s31
      %p40 = scmp.eq.s32.totalorder %s23, 1
      %p41 = por %p39, %p40
      %p42 = scmp.ne.s32.totalorder %s31, %s32
      %p43 = scmp.eq.s32.totalorder %s23, 0
      %p44 = por %p42, %p43
      %p45 = scmp.ne.s32.totalorder %s31, %s32
      %p46 = scmp.eq.s32.totalorder %s24, 1
      %p47 = por %p45, %p46
      %p49 = scmp.ne.s32.totalorder %s32, %s48
      %p50 = scmp.eq.s32.totalorder %s24, 0
      %p51 = por %p49, %p50
      %s53 = sadd.s32 %s52, 1
      %p56 = scmp.eq.s32.totalorder %s18, 1
      %p57 = scmp.ne.s32.totalorder %s52, %s54
      %p58 = scmp.eq.s32.totalorder %s18, 0
      %p59 = por %p57, %p58
      %p60 = scmp.ne.s32.totalorder %s52, %s54
      %p61 = scmp.eq.s32.totalorder %s23, 1
      %p62 = por %p60, %p61
      %p63 = scmp.ne.s32.totalorder %s54, %s55
      %p64 = scmp.eq.s32.totalorder %s23, 0
      %p65 = por %p63, %p64
      %p66 = scmp.ne.s32.totalorder %s54, %s55
      %p67 = scmp.eq.s32.totalorder %s24, 1
      %p68 = por %p66, %p67
      %p70 = scmp.ne.s32.totalorder %s55, %s69
      %p71 = scmp.eq.s32.totalorder %s24, 0
      %p72 = por %p70, %p71
      %s74 = sadd.s32 %s73, 1
      %p77 = scmp.eq.s32.totalorder %s18, 1
      %p78 = scmp.ne.s32.totalorder %s73, %s75
      %p79 = scmp.eq.s32.totalorder %s18, 0
      %p80 = por %p78, %p79
      %p81 = scmp.ne.s32.totalorder %s73, %s75
      %p82 = scmp.eq.s32.totalorder %s23, 1
      %p83 = por %p81, %p82
      %p84 = scmp.ne.s32.totalorder %s75, %s76
      %p85 = scmp.eq.s32.totalorder %s23, 0
      %p86 = por %p84, %p85
      %p87 = scmp.ne.s32.totalorder %s75, %s76
      %p88 = scmp.eq.s32.totalorder %s24, 1
      %p89 = por %p87, %p88
      %p91 = scmp.ne.s32.totalorder %s76, %s90
      %p92 = scmp.eq.s32.totalorder %s24, 0
      %p93 = por %p91, %p92
      %s95 = sadd.s32 %s94, 1
      %p98 = scmp.eq.s32.totalorder %s18, 1
      %p99 = scmp.ne.s32.totalorder %s94, %s96
      %p100 = scmp.eq.s32.totalorder %s18, 0
      %p101 = por %p99, %p100
      %p102 = scmp.ne.s32.totalorder %s94, %s96
      %p103 = scmp.eq.s32.totalorder %s23, 1
      %p104 = por %p102, %p103
      %p105 = scmp.ne.s32.totalorder %s96, %s97
      %p106 = scmp.eq.s32.totalorder %s23, 0
      %p107 = por %p105, %p106
      %p108 = scmp.ne.s32.totalorder %s96, %s97
      %p109 = scmp.eq.s32.totalorder %s24, 1
      %p110 = por %p108, %p109
      %p112 = scmp.ne.s32.totalorder %s97, %s111
      %p113 = scmp.eq.s32.totalorder %s24, 0
      %p114 = por %p112, %p113
      %s116 = sadd.s32 %s115, 1
      %p119 = scmp.eq.s32.totalorder %s18, 1
      %p120 = scmp.ne.s32.totalorder %s115, %s117
      %p121 = scmp.eq.s32.totalorder %s18, 0
      %p122 = por %p120, %p121
      %p123 = scmp.ne.s32.totalorder %s115, %s117
      %p124 = scmp.eq.s32.totalorder %s23, 1
      %p125 = por %p123, %p124
      %p126 = scmp.ne.s32.totalorder %s117, %s118
      %p127 = scmp.eq.s32.totalorder %s23, 0
      %p128 = por %p126, %p127
      %p129 = scmp.ne.s32.totalorder %s117, %s118
      %p130 = scmp.eq.s32.totalorder %s24, 1
      %p131 = por %p129, %p130
      %p133 = scmp.ne.s32.totalorder %s118, %s132
      %p134 = scmp.eq.s32.totalorder %s24, 0
      %p135 = por %p133, %p134
      %s136 = ssub.s32 %s18, %s25
      %p137 = scmp.eq.s32.totalorder %s136, 0
      %s139 = sadd.s32 %s138, 1
      %s140 = scalar_select %p137, %s138, %s139
      %p143 = pneg %p137
      %p144 = scmp.eq.s32.totalorder %s18, 1
      %p145 = por %p143, %p144
      %p146 = scmp.ne.s32.totalorder %s138, %s141
      %p147 = scmp.eq.s32.totalorder %s18, 0
      %p148 = por %p146, %p147
      %p149 = scmp.ne.s32.totalorder %s138, %s141
      %p150 = scmp.eq.s32.totalorder %s23, 1
      %p151 = por %p149, %p150
      %p152 = scmp.ne.s32.totalorder %s141, %s142
      %p153 = scmp.eq.s32.totalorder %s23, 0
      %p154 = por %p152, %p153
      %p155 = scmp.ne.s32.totalorder %s141, %s142
      %p156 = scmp.eq.s32.totalorder %s24, 1
      %p157 = por %p155, %p156
      %p159 = scmp.ne.s32.totalorder %s142, %s158
      %p160 = scmp.eq.s32.totalorder %s24, 0
      %p161 = por %p159, %p160
      %p162 = scmp.le.s32.totalorder 1, %s18
      %p163 = scmp.lt.s32.totalorder %s18, 3
      %p164 = pnand %p162, %p163
      %p165 = pneg %p164
      // Predicated region
      $region9: #{tpu_custom_call.1} parent=5 // pred_check
        _
      $region10: #{tpu_custom_call.1} parent=5 // pred_check_branch
        %167 = sbr.rel (%p164) target = $region12
      $region11: #{tpu_custom_call.1} parent=5 // pred_region
        %s168 = ssub.s32 %s18, 1
        // Predicated region
        $region13: #{tpu_custom_call.1} parent=11 // pred_check
          %p169 = pneg %p65
        $region14: #{tpu_custom_call.1} parent=11 // pred_check_branch
          %171 = sbr.rel (%p169) target = $region16
        $region15: #{tpu_custom_call.1} parent=11 // pred_region
          %s173 = ssub.s32 64, 64
          %174 = vsyncadd [#allocation6], %s173
          %s176 = sshll.u32 [#allocation5], 4
          %s177 = int_to_ptr.vmem [resolvable:$true] %s176
          %179 = dma.hbm_to_vmem [thread:$0]  %s1, 64, %s177, [#allocation6]
        $region16: #{tpu_custom_call.1} parent=11 // pred_fallthru
          _
        // Predicated region
        $region17: #{tpu_custom_call.1} parent=11 // pred_check
          %p180 = pneg %p86
        $region18: #{tpu_custom_call.1} parent=11 // pred_check_branch
          %182 = sbr.rel (%p180) target = $region20
        $region19: #{tpu_custom_call.1} parent=11 // pred_region
          _
        $region20: #{tpu_custom_call.1} parent=11 // pred_fallthru
          _
        // Predicated region
        $region21: #{tpu_custom_call.1} parent=11 // pred_check
          %p183 = pneg %p107
        $region22: #{tpu_custom_call.1} parent=11 // pred_check_branch
          %185 = sbr.rel (%p183) target = $region24
        $region23: #{tpu_custom_call.1} parent=11 // pred_region
          _
        $region24: #{tpu_custom_call.1} parent=11 // pred_fallthru
          _
        // Predicated region
        $region25: #{tpu_custom_call.1} parent=11 // pred_check
          %p186 = pneg %p128
        $region26: #{tpu_custom_call.1} parent=11 // pred_check_branch
          %188 = sbr.rel (%p186) target = $region28
        $region27: #{tpu_custom_call.1} parent=11 // pred_region
          _
        $region28: #{tpu_custom_call.1} parent=11 // pred_fallthru
          _
      $region12: #{tpu_custom_call.1} parent=5 // pred_fallthru
        _
      %p189 = scmp.lt.s32.totalorder %s18, 2
      // Predicated region
      $region29: #{tpu_custom_call.1} parent=5 // pred_check
        %p190 = pneg %p189
      $region30: #{tpu_custom_call.1} parent=5 // pred_check_branch
        %192 = sbr.rel (%p190) target = $region32
      $region31: #{tpu_custom_call.1} parent=5 // pred_region
        // Predicated region
        $region33: #{tpu_custom_call.1} parent=31 // pred_check
          %p193 = pneg %p38
        $region34: #{tpu_custom_call.1} parent=31 // pred_check_branch
          %195 = sbr.rel (%p193) target = $region36
        $region35: #{tpu_custom_call.1} parent=31 // pred_region
          %s196 = sand.u32 %s28, 1
          %s197 = scalar_lea.sflag [#allocation3], %s196
          %s198 = sand.u32 %s28, 1
          %s199 = smul.addr %s198, 4
          %s200 = scalar_lea.vmem [#allocation2], %s199
          %s202 = ssub.s32 64, 64
          %203 = vsyncadd %s197, %s202
          %s204 = smul.addr %s18, 64
          %s205 = scalar_lea.hbm %s0, %s204
          %s207 = sshll.u32 %s200, 4
          %s208 = int_to_ptr.vmem [resolvable:$true] %s207
          %210 = dma.hbm_to_vmem [thread:$0]  %s205, 64, %s208, %s197
        $region36: #{tpu_custom_call.1} parent=31 // pred_fallthru
          _
      $region32: #{tpu_custom_call.1} parent=5 // pred_fallthru
        _
      %p211 = scmp.le.s32.totalorder 1, %s18
      %p212 = scmp.lt.s32.totalorder %s18, 3
      %p213 = pnand %p211, %p212
      %p214 = pneg %p213
      // Predicated region
      $region37: #{tpu_custom_call.1} parent=5 // pred_check
        _
      $region38: #{tpu_custom_call.1} parent=5 // pred_check_branch
        %216 = sbr.rel (%p213) target = $region40
      $region39: #{tpu_custom_call.1} parent=5 // pred_region
        %s217 = ssub.s32 %s18, 1
        %s218 = sand.u32 %s31, 1
        %s219 = scalar_lea.sflag [#allocation3], %s218
        %s220 = sand.u32 %s31, 1
        %s221 = smul.addr %s220, 4
        %s222 = scalar_lea.vmem [#allocation2], %s221
        // Predicated region
        $region41: #{tpu_custom_call.1} parent=39 // pred_check
          %p223 = pneg %p44
        $region42: #{tpu_custom_call.1} parent=39 // pred_check_branch
          %225 = sbr.rel (%p223) target = $region44
        $region43: #{tpu_custom_call.1} parent=39 // pred_region
          %226 = dma.done %s219, 64
        $region44: #{tpu_custom_call.1} parent=39 // pred_fallthru
          _
        // Predicated region
        $region45: #{tpu_custom_call.1} parent=39 // pred_check
          %p227 = pneg %p65
        $region46: #{tpu_custom_call.1} parent=39 // pred_check_branch
          %229 = sbr.rel (%p227) target = $region48
        $region47: #{tpu_custom_call.1} parent=39 // pred_region
          %230 = dma.done [#allocation6], 64
        $region48: #{tpu_custom_call.1} parent=39 // pred_fallthru
          _
        %s231 = sand.u32 %s31, 1
        %s232 = scalar_lea.sflag [#allocation3], %s231
        %s233 = sand.u32 %s31, 1
        %s234 = smul.addr %s233, 4
        %s235 = scalar_lea.vmem [#allocation2], %s234
        %p236 = pneg %p44
        %p237 = pneg %p41
        %p238 = pneg %p65
        %p239 = pneg %p62
        %p240 = pneg %p86
        %p241 = pneg %p83
        %p242 = pneg %p107
        %p243 = pneg %p104
        %p244 = pneg %p128
        %p245 = pneg %p125
        %p246 = pneg %p154
        %p247 = pneg %p151
        %s248 = sand.u32 %s141, 1
        %s249 = scalar_lea.sflag [#allocation4], %s248
        %s250 = sand.u32 %s141, 1
        %s251 = smul.addr %s250, 4
        %s252 = scalar_lea.vmem [#allocation7], %s251
        %v253 = vld [vmem:[%s222] sm:$0xf]
        %v254 = vunpack.c.l.bf16 %v253
        %v255 = vld [vmem:[#allocation5] sm:$0xf]
        %v256 = vunpack.c.l.bf16 %v255
        %v257 = vadd.f32 %v254, %v256
        %v258 = vld [vmem:[%s2] sm:$0x1]
        %v259 = vunpack.c.l.bf16 %v258
        %v260 = vlaneseq
        %v261 = vshrl.u32 %v260, 7
        %v262 = vsub.s32 0, %v261
        %v263 = vrot.slane %v259, %v262
        %v264 = vadd.f32 %v257, %v263
        %vm265 = vcmask 261120
        %v266 = vsel %vm265, %v264, 0.0
        %267 = vadd.xlane.f32.xlu0 %v266
        %v268 = vpop.xlane.xlu0 %267
        %v269 = vrcp.pop 32.0
        %v270 = vmul.f32 %v268, %v269
        %v271 = vsub.f32 %v264, %v270
        %v272 = vmul.f32 %v271, %v271
        %v273 = vsel %vm265, %v272, 0.0
        %274 = vadd.xlane.f32.xlu0 %v273
        %v275 = vpop.xlane.xlu0 %274
        %v276 = vmul.f32 %v275, %v269
        %v277 = vadd.f32 %v276, 1e-12
        %v278 = vrsqrt.pop %v277
        %v279 = vmul.f32 %v271, %v278
        %v280 = vld [vmem:[%s3] sm:$0x1]
        %v282 = vlaneseq
        %v283 = vshrl.u32 %v282, 7
        %v284 = vsub.s32 0, %v283
        %v285 = vrot.slane %v280, %v284
        %v287 = vmul.f32 %v279, %v285
        %v288 = vld [vmem:[%s4] sm:$0x1]
        %v290 = vlaneseq
        %v291 = vshrl.u32 %v290, 7
        %v292 = vsub.s32 0, %v291
        %v293 = vrot.slane %v288, %v292
        %v295 = vadd.f32 %v287, %v293
        %v296 = vpack.c.bf16 %v295, %v295
        %vm297 = vcmask 257024
        %298 = vst.msk [vmem:[%s252] sm:$0xf] %vm297, %v296
        %s299 = sand.u32 %s141, 1
        %s300 = scalar_lea.sflag [#allocation4], %s299
        %s301 = sand.u32 %s141, 1
        %s302 = smul.addr %s301, 4
        %s303 = scalar_lea.vmem [#allocation7], %s302
        // Predicated region
        $region49: #{tpu_custom_call.1} parent=39 // pred_check
          %p304 = pneg %p151
        $region50: #{tpu_custom_call.1} parent=39 // pred_check_branch
          %306 = sbr.rel (%p304) target = $region52
        $region51: #{tpu_custom_call.1} parent=39 // pred_region
          %s308 = ssub.s32 64, 64
          %309 = vsyncadd %s300, %s308
          %s310 = smul.addr %s23, 64
          %s311 = scalar_lea.hbm %s5, %s310
          %s313 = sshll.u32 %s303, 4
          %s314 = int_to_ptr.vmem [resolvable:$true] %s313
          %316 = dma.vmem_to_hbm [thread:$0]  %s314, 64, %s311, %s300
        $region52: #{tpu_custom_call.1} parent=39 // pred_fallthru
          _
      $region40: #{tpu_custom_call.1} parent=5 // pred_fallthru
        _
      %p317 = scmp.le.s32.totalorder 2, %s18
      // Predicated region
      $region53: #{tpu_custom_call.1} parent=5 // pred_check
        %p318 = pneg %p317
      $region54: #{tpu_custom_call.1} parent=5 // pred_check_branch
        %320 = sbr.rel (%p318) target = $region56
      $region55: #{tpu_custom_call.1} parent=5 // pred_region
        %s321 = ssub.s32 %s18, 2
        // Predicated region
        $region57: #{tpu_custom_call.1} parent=55 // pred_check
          %p322 = pneg %p157
        $region58: #{tpu_custom_call.1} parent=55 // pred_check_branch
          %324 = sbr.rel (%p322) target = $region60
        $region59: #{tpu_custom_call.1} parent=55 // pred_region
          %s325 = sand.u32 %s142, 1
          %s326 = scalar_lea.sflag [#allocation4], %s325
          %s327 = sand.u32 %s142, 1
          %s328 = smul.addr %s327, 4
          %s329 = scalar_lea.vmem [#allocation7], %s328
          %330 = dma.done %s326, 64
        $region60: #{tpu_custom_call.1} parent=55 // pred_fallthru
          _
      $region56: #{tpu_custom_call.1} parent=5 // pred_fallthru
        _
    $region6: #{tpu_custom_call.1} parent=1 // loop_footer
      %s22 = sadd.s32 1, %s18
    $region7: #{tpu_custom_call.1} parent=1 // loop_footer_branch
      %17 = sbr.rel target = $region3
    $region8: #{tpu_custom_call.1} parent=1 // loop_exit
      _
    %331 = vsyncpa [#allocation3], 1
    %s332 = scalar_lea.sflag [#allocation3], 1
    %333 = vsyncpa %s332, 1
    %334 = vsyncpa [#allocation6], 1
    %335 = vsyncpa [#allocation4], 1
    %s336 = scalar_lea.sflag [#allocation4], 1
    %337 = vsyncpa %s336, 1

</llo_original>
